<compile_context>
chip_gen: v7x
topology: tpu7x:2x2x1
jax: 0.10.0
libtpu: 0.0.40
codegen_flags: <defaults>
</compile_context>

<pallas_src>
import numpy as np
import jax
import jax.numpy as jnp
from jax.experimental import pallas as pl
from jax.experimental.pallas import tpu as pltpu

OUTPUT_SIZE = 10           # OUTPUT_SIZE is undefined in the reference; pick 10.
N, CIN, H, W = 2, 1, 4, 4  # fc1 expects 16*4*4 features -> spatial must be 4x4, CIN=1
COUT = 16
K = 3
HW = H * W                 # 16
FC1_IN = COUT * HW         # 256
FC1_OUT = 10

AUG_IN = HW + 1            # 17   (input features + constant-1 column)
AUG_MID = HW * COUT + 1    # 257  (conv activations + constant-1 column carried through ReLU)


# ---------------- Pallas kernel (whole forward, fused, bias-free) ----------------

def fused_cnn_kernel(xf_ref, bigw_ref, wf_ref, o_ref):
    # xf:   (N, 17)       flattened input + constant-1 column        (f32)
    # bigw: (17, 257)     conv1 lowered to matmul, bias row folded,  (bf16)
    #                     last column produces a literal 1.0
    # wf:   (257, 10)     fc1∘fc2 fused weight, fused bias in row 256 (bf16)
    act = jnp.maximum(
        jnp.dot(xf_ref[...], bigw_ref[...].astype(jnp.float32),
                preferred_element_type=jnp.float32),
        0.0)                                            # conv1 + bias + ReLU (1.0 col survives)
    o_ref[...] = jnp.dot(act, wf_ref[...].astype(jnp.float32),
                         preferred_element_type=jnp.float32)   # fc1 (dropout=id) + fc2 + biases


# ---------------- one-time parameter preparation (off the hot path) ----------------

def prepare_params(params):
    wc, bc, w1, b1, w2, b2 = params
    wc_n = np.asarray(wc)                                      # (COUT, CIN=1, K, K)
    bc_n = np.asarray(bc)                                      # (COUT,)

    # Lowered conv operator with bias folded in:
    #   conv_flat[n, (y*W+x)*COUT + c] = (xf_aug @ bigw_aug)[n, ...]
    #   bigw_aug[yin*W+xin, (y*W+x)*COUT + c] = wc[c, 0, yin-y+1, xin-x+1]  (zero padding folded)
    #   bigw_aug[HW, col] = conv bias (multiplied by the constant-1 input column)
    #   bigw_aug[:, -1]   = e_HW -> activation column HW*COUT is exactly 1.0 after ReLU
    bigw_aug = np.zeros((AUG_IN, AUG_MID), np.float32)
    for y in range(H):
        for x in range(W):
            col0 = (y * W + x) * COUT
            for kh in range(K):
                for kw in range(K):
                    yin, xin = y + kh - 1, x + kw - 1
                    if 0 <= yin < H and 0 <= xin < W:
                        bigw_aug[yin * W + xin, col0:col0 + COUT] = wc_n[:, 0, kh, kw]
    bigw_aug[HW, :HW * COUT] = np.tile(bc_n, HW)               # conv bias row
    bigw_aug[HW, HW * COUT] = 1.0                              # dummy column -> literal 1.0

    # fc1 weight rows permuted to our (hw, c) activation layout
    # (PyTorch .view flattens channel-major: idx = c*(H*W) + hw).
    w1p = jnp.transpose(w1.reshape(FC1_OUT, COUT, HW), (2, 1, 0)).reshape(FC1_IN, FC1_OUT)
    wf = w1p @ w2.T                                            # (256, OUTPUT_SIZE) fused weight
    bf = b1 @ w2.T + b2                                        # (OUTPUT_SIZE,)     fused bias
    wf_aug = jnp.concatenate([wf, bf[None, :]], axis=0)        # (257, OUTPUT_SIZE)

    return (jnp.asarray(bigw_aug, dtype=jnp.bfloat16),
            wf_aug.astype(jnp.bfloat16))


# ---------------- hot path ----------------

def _augment(x):
    xf = x.reshape(x.shape[0], HW)                 # NCHW with CIN=1 -> (N, 16)
    ones = jnp.ones((x.shape[0], 1), xf.dtype)
    return jnp.concatenate([xf, ones], axis=1)     # (N, 17); fuses into the operand copy


_COST = pl.CostEstimate(
    flops=2 * N * (AUG_IN * AUG_MID + AUG_MID * OUTPUT_SIZE),
    transcendentals=0,
    bytes_accessed=(N * AUG_IN * 4 + AUG_IN * AUG_MID * 2
                    + AUG_MID * OUTPUT_SIZE * 2 + N * OUTPUT_SIZE * 4),
)


@jax.jit
def cnn_forward(x, prepared):
    bigw_aug, wf_aug = prepared
    xf_aug = _augment(x)
    return pl.pallas_call(
        fused_cnn_kernel,
        out_shape=jax.ShapeDtypeStruct((N, OUTPUT_SIZE), jnp.float32),
        in_specs=[
            pl.BlockSpec(memory_space=pltpu.MemorySpace.VMEM),
            pl.BlockSpec(memory_space=pltpu.MemorySpace.VMEM),
            pl.BlockSpec(memory_space=pltpu.MemorySpace.VMEM),
        ],
        out_specs=pl.BlockSpec(memory_space=pltpu.MemorySpace.VMEM),
        cost_estimate=_COST,
    )(xf_aug, bigw_aug, wf_aug)


# ---------------- references ----------------

@jax.jit
def ref_fused_jnp(x, prepared):
    # Plain-jnp two-dot version with the SAME (bf16-rounded) folded weights:
    # validates the kernel math exactly and is the honest XLA baseline.
    bigw_aug, wf_aug = prepared
    xf_aug = _augment(x)
    act = jnp.maximum(
        jnp.dot(xf_aug, bigw_aug.astype(jnp.float32),
                precision=jax.lax.Precision.HIGHEST), 0.0)
    return jnp.dot(act, wf_aug.astype(jnp.float32),
                   precision=jax.lax.Precision.HIGHEST)


def ref_forward(x, params):
    # Pure f32 reference of the original module semantics (eval mode).
    wc, bc, w1, b1, w2, b2 = params
    y = jax.lax.conv_general_dilated(
        x, wc, window_strides=(1, 1), padding=((1, 1), (1, 1)),
        dimension_numbers=("NCHW", "OIHW", "NCHW"),
        precision=jax.lax.Precision.HIGHEST)
    y = jnp.maximum(y + bc[None, :, None, None], 0.0)
    f = y.reshape(x.shape[0], -1)            # channel-major flatten, like torch .view
    z1 = f @ w1.T + b1                       # dropout = identity (eval)
    return z1 @ w2.T + b2


def init_params(key):
    k1, k2, k3, k4, k5, k6 = jax.random.split(key, 6)
    wc = jax.random.normal(k1, (COUT, CIN, K, K), jnp.float32) * 0.1   # conv1 (O,I,kh,kw)
    bc = jax.random.normal(k2, (COUT,), jnp.float32) * 0.1
    w1 = jax.random.normal(k3, (FC1_OUT, FC1_IN), jnp.float32) * 0.05  # fc1 (out,in) torch layout
    b1 = jax.random.normal(k4, (FC1_OUT,), jnp.float32) * 0.05
    w2 = jax.random.normal(k5, (OUTPUT_SIZE, FC1_OUT), jnp.float32) * 0.1
    b2 = jax.random.normal(k6, (OUTPUT_SIZE,), jnp.float32) * 0.1
    return (wc, bc, w1, b1, w2, b2)


if __name__ == "__main__":
    key = jax.random.PRNGKey(0)
    kx, kp = jax.random.split(key)
    x = jax.random.normal(kx, (N, CIN, H, W), jnp.float32)
    params = init_params(kp)
    prepared = prepare_params(params)        # one-time weight prep, off the hot path

    out = cnn_forward(x, prepared)
    out = jax.block_until_ready(out)
    assert out.shape == (N, OUTPUT_SIZE)

    # Tight check: kernel vs plain-jnp with identical (bf16-quantized) folded weights.
    ref_q = ref_fused_jnp(x, prepared)
    assert jnp.allclose(out, ref_q, atol=1e-4, rtol=1e-4), "mismatch vs fused jnp reference"

    # Loose check: vs the original full-f32 module semantics (only deviation is the
    # intentional bf16 weight quantization, ~0.4% relative).
    ref = ref_forward(x, params)
    assert jnp.allclose(out, ref, atol=2e-2, rtol=2e-2), "mismatch vs f32 module reference"

    print("KERNEL_OK")
</pallas_src>

<mosaic_0001>
module attributes {stable_mosaic.version = 11 : i64} {
  func.func @fused_cnn_kernel(%arg0: memref<2x17xf32, #tpu.memory_space<vmem>>, %arg1: memref<17x257xbf16, #tpu.memory_space<vmem>>, %arg2: memref<257x10xbf16, #tpu.memory_space<vmem>>, %arg3: memref<2x10xf32, #tpu.memory_space<vmem>>) attributes {dimension_semantics = [], scalar_prefetch = 0 : i64, scratch_operands = 0 : i64, tpu.core_type = #tpu.core_type<tc>} {
    %c0 = arith.constant 0 : index
    %c0_0 = arith.constant 0 : index
    %0 = vector.load %arg0[%c0, %c0_0] : memref<2x17xf32, #tpu.memory_space<vmem>>, vector<2x17xf32>
    %c0_1 = arith.constant 0 : index
    %c0_2 = arith.constant 0 : index
    %1 = vector.load %arg1[%c0_1, %c0_2] : memref<17x257xbf16, #tpu.memory_space<vmem>>, vector<17x257xbf16>
    %2 = arith.extf %1 : vector<17x257xbf16> to vector<17x257xf32>
    %cst = arith.constant dense<0.000000e+00> : vector<2x257xf32>
    %3 = tpu.matmul %0, %2, %cst {dimension_numbers = #tpu.dot_dimension_numbers<[1], [0], [0], [1], [0, 0, 1, 1], [], []>} : vector<2x17xf32>, vector<17x257xf32>, vector<2x257xf32> -> vector<2x257xf32>
    %cst_3 = arith.constant 0.000000e+00 : f32
    %4 = vector.broadcast %cst_3 : f32 to vector<2x257xf32>
    %5 = arith.maximumf %3, %4 : vector<2x257xf32>
    %c0_4 = arith.constant 0 : index
    %c0_5 = arith.constant 0 : index
    %6 = vector.load %arg2[%c0_4, %c0_5] : memref<257x10xbf16, #tpu.memory_space<vmem>>, vector<257x10xbf16>
    %7 = arith.extf %6 : vector<257x10xbf16> to vector<257x10xf32>
    %cst_6 = arith.constant dense<0.000000e+00> : vector<2x10xf32>
    %8 = tpu.matmul %5, %7, %cst_6 {dimension_numbers = #tpu.dot_dimension_numbers<[1], [0], [0], [1], [0, 0, 1, 1], [], []>} : vector<2x257xf32>, vector<257x10xf32>, vector<2x10xf32> -> vector<2x10xf32>
    %c0_7 = arith.constant 0 : index
    %c0_8 = arith.constant 0 : index
    %9 = vector.load %arg3[%c0_7, %c0_8] : memref<2x10xf32, #tpu.memory_space<vmem>>, vector<2x10xf32>
    tpu.vector_store %arg3[%c0_7, %c0_8], %8 {strides = array<i32>} : memref<2x10xf32, #tpu.memory_space<vmem>>, vector<2x10xf32>,
    return
  }
}

</mosaic_0001>

<llo_original>
// kernel: cnn_forward.1
$region0: #{cnn_forward.1}
  #allocation0 [shape = 'u32[]', space=smem, size = 0x4, offset = 0x4, fixed_abs, tag = 'smem constant byte address 0x4 - core index']
  #allocation1 [shape = 'u32[144,128]{1,0:T(1,128)}', space=vmem, size = 0x12000, scoped, tag = 'internal scratch']
  %s0 = inlined_call_operand.vmem [shape: f32[2,17], index: 0, kind: input, shape index: {}]
  %s1 = inlined_call_operand.vmem [shape: bf16[17,257], index: 1, kind: input, shape index: {}]
  %s2 = inlined_call_operand.vmem [shape: bf16[257,10], index: 2, kind: input, shape index: {}]
  %s3 = inlined_call_operand.hbm [shape: f32[2,10], index: 3, kind: output, shape index: {}]
  %s4 = sld [smem:[#allocation0]]
  $region22: #{cnn_forward.1} parent=0
    _
  %s6 = ssub.s32 1, %s4
  %s7 = scalar_select 0, %s6, %s4
  $region1: #{cnn_forward.1} parent=0
    #allocation2 [shape = 'u8[1024]{0}', space=vmem, size = 0x400, scoped, tag = 'output window, operand 0, single buffered']
    #allocation3 [shape = 's32[1]{0}', space=sflag, size = 0x4, scoped, tag = 'scoped memory for cnn_forward.1']
    %8 = vsyncpa [#allocation3], 0
    // Predicated region
    $region2: #{cnn_forward.1} parent=1 // pred_check
      _
    $region3: #{cnn_forward.1} parent=1 // pred_check_branch
      %10 = sbr.rel (0) target = $region5
    $region4: #{cnn_forward.1} parent=1 // pred_region
      _
    $region5: #{cnn_forward.1} parent=1 // pred_fallthru
      _
    // Predicated region
    $region6: #{cnn_forward.1} parent=1 // pred_check
      _
    $region7: #{cnn_forward.1} parent=1 // pred_check_branch
      %12 = sbr.rel (0) target = $region9
    $region8: #{cnn_forward.1} parent=1 // pred_region
      _
    $region9: #{cnn_forward.1} parent=1 // pred_fallthru
      _
    // Predicated region
    $region10: #{cnn_forward.1} parent=1 // pred_check
      _
    $region11: #{cnn_forward.1} parent=1 // pred_check_branch
      %14 = sbr.rel (0) target = $region13
    $region12: #{cnn_forward.1} parent=1 // pred_region
      _
    $region13: #{cnn_forward.1} parent=1 // pred_fallthru
      _
    %v15 = vld [vmem:[%s0] sm:$0x3]
    %v16 = vld [vmem:[%s1] sm:$0xff]
    %v17 = vld [vmem:[%s1 + $0x8] sm:$0xf]
    %v18 = vld [vmem:[%s1 + $0xc] sm:$0xff]
    %v19 = vld [vmem:[%s1 + $0x14] sm:$0xf]
    %v20 = vld [vmem:[%s1 + $0x18] sm:$0x11]
    %v21 = vld [vmem:[%s1 + $0x20] sm:$0x1]
    %v22 = vunpack.c.l.bf16 %v16
    %v23 = vunpack.c.h.bf16 %v16
    %v24 = vunpack.c.l.bf16 %v17
    %v25 = vunpack.c.l.bf16 %v18
    %v26 = vunpack.c.h.bf16 %v18
    %v27 = vunpack.c.l.bf16 %v19
    %v28 = vunpack.c.l.bf16 %v20
    %v29 = vunpack.c.h.bf16 %v20
    %v30 = vunpack.c.l.bf16 %v21
    %vm31 = vcmask 138240
    %v33 = vsel %vm31, %v15, 0
    %vm35 = vcmask 1040384
    %v37 = vsel %vm35, %v28, 0
    %v40 = vsel %vm35, %v29, 0
    %v43 = vsel %vm35, %v30, 0
    %45 = vmatprep.subr.mxu0 %v23
    %46 = vmatpush1.msra.mxu0 %v22
    %47 = vmatprep.subr.mxu0 %v26
    %48 = vmatpush1.msra.mxu0 %v25
    %49 = vmatprep.subr.mxu0 %v40
    %50 = vmatpush1.msra.mxu0 %v37
    %51 = vmatprep.subr.mxu0 0.0
    %52 = vmatpush1.msra.mxu0 0.0
    %53 = vmatprep.subr.mxu0 0.0
    %54 = vmatpush1.msra.mxu0 0.0
    %55 = vmatprep.subr.mxu0 0.0
    %56 = vmatpush1.msra.mxu0 0.0
    %57 = vmatprep.subr.mxu0 0.0
    %58 = vmatpush1.msra.mxu0 0.0
    %59 = vmatprep.subr.mxu0 0.0
    %60 = vmatpush1.msra.mxu0 0.0
    %61 = vmatprep.subr.mxu0 0.0
    %62 = vmatpush1.msra.mxu0 0.0
    %63 = vmatprep.subr.mxu0 0.0
    %64 = vmatpush1.msra.mxu0 0.0
    %65 = vmatprep.subr.mxu0 0.0
    %66 = vmatpush1.msra.mxu0 0.0
    %67 = vmatprep.subr.mxu0 0.0
    %68 = vmatpush1.msra.mxu0 0.0
    %69 = vmatprep.subr.mxu0 0.0
    %70 = vmatpush1.msra.mxu0 0.0
    %71 = vmatprep.subr.mxu0 0.0
    %72 = vmatpush1.msra.mxu0 0.0
    %73 = vmatprep.subr.mxu0 0.0
    %74 = vmatpush1.msra.mxu0 0.0
    %75 = vmatprep.subr.mxu0 0.0
    %76 = vmatpush1.msra.mxu0 0.0
    %77 = vmatprep.subr.mxu0 0.0
    %78 = vmatpush1.msra.mxu0 0.0
    %79 = vmatprep.subr.mxu0 0.0
    %80 = vmatpush1.msra.mxu0 0.0
    %81 = vmatprep.subr.mxu0 0.0
    %82 = vmatpush1.msra.mxu0 0.0
    %83 = vmatprep.subr.mxu0 0.0
    %84 = vmatpush1.msra.mxu0 0.0
    %85 = vmatprep.subr.mxu0 0.0
    %86 = vmatpush1.msra.mxu0 0.0
    %87 = vmatprep.subr.mxu0 0.0
    %88 = vmatpush1.msra.mxu0 0.0
    %89 = vmatprep.subr.mxu0 0.0
    %90 = vmatpush1.msra.mxu0 0.0
    %91 = vmatprep.subr.mxu0 0.0
    %92 = vmatpush1.msra.mxu0 0.0
    %93 = vmatprep.subr.mxu0 0.0
    %94 = vmatpush1.msra.mxu0 0.0
    %95 = vmatprep.subr.mxu0 0.0
    %96 = vmatpush1.msra.mxu0 0.0
    %97 = vmatprep.subr.mxu0 0.0
    %98 = vmatpush1.msra.mxu0 0.0
    %99 = vmatprep.subr.mxu0 0.0
    %100 = vmatpush1.msra.mxu0 0.0
    %101 = vmatprep.subr.mxu0 0.0
    %102 = vmatpush1.msra.mxu0 0.0
    %103 = vmatprep.subr.mxu0 0.0
    %104 = vmatpush1.msra.mxu0 0.0
    %105 = vmatprep.subr.mxu0 0.0
    %106 = vmatpush1.msra.mxu0 0.0
    %107 = vmatprep.subr.mxu0 0.0
    %108 = vmatpush1.msra.mxu0 0.0
    %109 = vmatprep.mubr.f32.mxu0 0.0
    %110 = vmatmul.mubr.f32.gmra.mrb[0].mxu0 %v33
    %v111 = vpop.f32.mrb[0].mxu0
    %v112 = vadd.f32 0.0, %v111
    %v113 = vpop.f32.mrb[0].mxu0
    %v114 = vadd.f32 0.0, %v113
    %115 = vdwg.mxu0
    %116 = vmatprep.subr.mxu0 0.0
    %117 = vmatpush1.msra.mxu0 %v24
    %118 = vmatprep.subr.mxu0 0.0
    %119 = vmatpush1.msra.mxu0 %v27
    %120 = vmatprep.subr.mxu0 0.0
    %121 = vmatpush1.msra.mxu0 %v43
    %122 = vmatprep.subr.mxu0 0.0
    %123 = vmatpush1.msra.mxu0 0.0
    %124 = vmatprep.subr.mxu0 0.0
    %125 = vmatpush1.msra.mxu0 0.0
    %126 = vmatprep.subr.mxu0 0.0
    %127 = vmatpush1.msra.mxu0 0.0
    %128 = vmatprep.subr.mxu0 0.0
    %129 = vmatpush1.msra.mxu0 0.0
    %130 = vmatprep.subr.mxu0 0.0
    %131 = vmatpush1.msra.mxu0 0.0
    %132 = vmatprep.subr.mxu0 0.0
    %133 = vmatpush1.msra.mxu0 0.0
    %134 = vmatprep.subr.mxu0 0.0
    %135 = vmatpush1.msra.mxu0 0.0
    %136 = vmatprep.subr.mxu0 0.0
    %137 = vmatpush1.msra.mxu0 0.0
    %138 = vmatprep.subr.mxu0 0.0
    %139 = vmatpush1.msra.mxu0 0.0
    %140 = vmatprep.subr.mxu0 0.0
    %141 = vmatpush1.msra.mxu0 0.0
    %142 = vmatprep.subr.mxu0 0.0
    %143 = vmatpush1.msra.mxu0 0.0
    %144 = vmatprep.subr.mxu0 0.0
    %145 = vmatpush1.msra.mxu0 0.0
    %146 = vmatprep.subr.mxu0 0.0
    %147 = vmatpush1.msra.mxu0 0.0
    %148 = vmatprep.subr.mxu0 0.0
    %149 = vmatpush1.msra.mxu0 0.0
    %150 = vmatprep.subr.mxu0 0.0
    %151 = vmatpush1.msra.mxu0 0.0
    %152 = vmatprep.subr.mxu0 0.0
    %153 = vmatpush1.msra.mxu0 0.0
    %154 = vmatprep.subr.mxu0 0.0
    %155 = vmatpush1.msra.mxu0 0.0
    %156 = vmatprep.subr.mxu0 0.0
    %157 = vmatpush1.msra.mxu0 0.0
    %158 = vmatprep.subr.mxu0 0.0
    %159 = vmatpush1.msra.mxu0 0.0
    %160 = vmatprep.subr.mxu0 0.0
    %161 = vmatpush1.msra.mxu0 0.0
    %162 = vmatprep.subr.mxu0 0.0
    %163 = vmatpush1.msra.mxu0 0.0
    %164 = vmatprep.subr.mxu0 0.0
    %165 = vmatpush1.msra.mxu0 0.0
    %166 = vmatprep.subr.mxu0 0.0
    %167 = vmatpush1.msra.mxu0 0.0
    %168 = vmatprep.subr.mxu0 0.0
    %169 = vmatpush1.msra.mxu0 0.0
    %170 = vmatprep.subr.mxu0 0.0
    %171 = vmatpush1.msra.mxu0 0.0
    %172 = vmatprep.subr.mxu0 0.0
    %173 = vmatpush1.msra.mxu0 0.0
    %174 = vmatprep.subr.mxu0 0.0
    %175 = vmatpush1.msra.mxu0 0.0
    %176 = vmatprep.subr.mxu0 0.0
    %177 = vmatpush1.msra.mxu0 0.0
    %178 = vmatprep.subr.mxu0 0.0
    %179 = vmatpush1.msra.mxu0 0.0
    %180 = vmatprep.mubr.f32.mxu0 0.0
    %181 = vmatmul.mubr.f32.gmra.mrb[0].mxu0 %v33
    %v182 = vpop.f32.mrb[0].mxu0
    %v183 = vadd.f32 0.0, %v182
    %v184 = vpop.f32.mrb[0].mxu0
    %185 = vdwg.mxu0
    %v186 = vmax.f32 %v112, 0.0
    %v187 = vmax.f32 %v114, 0.0
    %v188 = vmax.f32 %v183, 0.0
    %v189 = vld [vmem:[%s2] sm:$0xf]
    %v190 = vld [vmem:[%s2 + $0x4] sm:$0xf]
    %v191 = vld [vmem:[%s2 + $0x8] sm:$0xf]
    %v192 = vld [vmem:[%s2 + $0xc] sm:$0xf]
    %v193 = vld [vmem:[%s2 + $0x10] sm:$0xf]
    %v194 = vld [vmem:[%s2 + $0x14] sm:$0xf]
    %v195 = vld [vmem:[%s2 + $0x18] sm:$0xf]
    %v196 = vld [vmem:[%s2 + $0x1c] sm:$0xf]
    %v197 = vld [vmem:[%s2 + $0x20] sm:$0xf]
    %v198 = vld [vmem:[%s2 + $0x24] sm:$0xf]
    %v199 = vld [vmem:[%s2 + $0x28] sm:$0xf]
    %v200 = vld [vmem:[%s2 + $0x2c] sm:$0xf]
    %v201 = vld [vmem:[%s2 + $0x30] sm:$0xf]
    %v202 = vld [vmem:[%s2 + $0x34] sm:$0xf]
    %v203 = vld [vmem:[%s2 + $0x38] sm:$0xf]
    %v204 = vld [vmem:[%s2 + $0x3c] sm:$0xf]
    %v205 = vld [vmem:[%s2 + $0x40] sm:$0xf]
    %v206 = vld [vmem:[%s2 + $0x44] sm:$0xf]
    %v207 = vld [vmem:[%s2 + $0x48] sm:$0xf]
    %v208 = vld [vmem:[%s2 + $0x4c] sm:$0xf]
    %v209 = vld [vmem:[%s2 + $0x50] sm:$0xf]
    %v210 = vld [vmem:[%s2 + $0x54] sm:$0xf]
    %v211 = vld [vmem:[%s2 + $0x58] sm:$0xf]
    %v212 = vld [vmem:[%s2 + $0x5c] sm:$0xf]
    %v213 = vld [vmem:[%s2 + $0x60] sm:$0xf]
    %v214 = vld [vmem:[%s2 + $0x64] sm:$0xf]
    %v215 = vld [vmem:[%s2 + $0x68] sm:$0xf]
    %v216 = vld [vmem:[%s2 + $0x6c] sm:$0xf]
    %v217 = vld [vmem:[%s2 + $0x70] sm:$0xf]
    %v218 = vld [vmem:[%s2 + $0x74] sm:$0xf]
    %v219 = vld [vmem:[%s2 + $0x78] sm:$0xf]
    %v220 = vld [vmem:[%s2 + $0x7c] sm:$0xf]
    %v221 = vld [vmem:[%s2 + $0x80] sm:$0x1]
    %v222 = vunpack.c.l.bf16 %v189
    %v223 = vunpack.c.l.bf16 %v190
    %v224 = vunpack.c.l.bf16 %v191
    %v225 = vunpack.c.l.bf16 %v192
    %v226 = vunpack.c.l.bf16 %v193
    %v227 = vunpack.c.l.bf16 %v194
    %v228 = vunpack.c.l.bf16 %v195
    %v229 = vunpack.c.l.bf16 %v196
    %v230 = vunpack.c.l.bf16 %v197
    %v231 = vunpack.c.l.bf16 %v198
    %v232 = vunpack.c.l.bf16 %v199
    %v233 = vunpack.c.l.bf16 %v200
    %v234 = vunpack.c.l.bf16 %v201
    %v235 = vunpack.c.l.bf16 %v202
    %v236 = vunpack.c.l.bf16 %v203
    %v237 = vunpack.c.l.bf16 %v204
    %v238 = vunpack.c.l.bf16 %v205
    %v239 = vunpack.c.l.bf16 %v206
    %v240 = vunpack.c.l.bf16 %v207
    %v241 = vunpack.c.l.bf16 %v208
    %v242 = vunpack.c.l.bf16 %v209
    %v243 = vunpack.c.l.bf16 %v210
    %v244 = vunpack.c.l.bf16 %v211
    %v245 = vunpack.c.l.bf16 %v212
    %v246 = vunpack.c.l.bf16 %v213
    %v247 = vunpack.c.l.bf16 %v214
    %v248 = vunpack.c.l.bf16 %v215
    %v249 = vunpack.c.l.bf16 %v216
    %v250 = vunpack.c.l.bf16 %v217
    %v251 = vunpack.c.l.bf16 %v218
    %v252 = vunpack.c.l.bf16 %v219
    %v253 = vunpack.c.l.bf16 %v220
    %v254 = vunpack.c.l.bf16 %v221
    %vm255 = vcmask 7168
    %v257 = vsel %vm255, %v188, 0
    %v260 = vsel %vm35, %v254, 0
    %262 = vmatprep.subr.mxu0 0.0
    %263 = vmatpush1.msra.mxu0 %v222
    %264 = vmatprep.subr.mxu0 0.0
    %265 = vmatpush1.msra.mxu0 %v223
    %266 = vmatprep.subr.mxu0 0.0
    %267 = vmatpush1.msra.mxu0 %v224
    %268 = vmatprep.subr.mxu0 0.0
    %269 = vmatpush1.msra.mxu0 %v225
    %270 = vmatprep.subr.mxu0 0.0
    %271 = vmatpush1.msra.mxu0 %v226
    %272 = vmatprep.subr.mxu0 0.0
    %273 = vmatpush1.msra.mxu0 %v227
    %274 = vmatprep.subr.mxu0 0.0
    %275 = vmatpush1.msra.mxu0 %v228
    %276 = vmatprep.subr.mxu0 0.0
    %277 = vmatpush1.msra.mxu0 %v229
    %278 = vmatprep.subr.mxu0 0.0
    %279 = vmatpush1.msra.mxu0 %v230
    %280 = vmatprep.subr.mxu0 0.0
    %281 = vmatpush1.msra.mxu0 %v231
    %282 = vmatprep.subr.mxu0 0.0
    %283 = vmatpush1.msra.mxu0 %v232
    %284 = vmatprep.subr.mxu0 0.0
    %285 = vmatpush1.msra.mxu0 %v233
    %286 = vmatprep.subr.mxu0 0.0
    %287 = vmatpush1.msra.mxu0 %v234
    %288 = vmatprep.subr.mxu0 0.0
    %289 = vmatpush1.msra.mxu0 %v235
    %290 = vmatprep.subr.mxu0 0.0
    %291 = vmatpush1.msra.mxu0 %v236
    %292 = vmatprep.subr.mxu0 0.0
    %293 = vmatpush1.msra.mxu0 %v237
    %294 = vmatprep.subr.mxu0 0.0
    %295 = vmatpush1.msra.mxu0 %v238
    %296 = vmatprep.subr.mxu0 0.0
    %297 = vmatpush1.msra.mxu0 %v239
    %298 = vmatprep.subr.mxu0 0.0
    %299 = vmatpush1.msra.mxu0 %v240
    %300 = vmatprep.subr.mxu0 0.0
    %301 = vmatpush1.msra.mxu0 %v241
    %302 = vmatprep.subr.mxu0 0.0
    %303 = vmatpush1.msra.mxu0 %v242
    %304 = vmatprep.subr.mxu0 0.0
    %305 = vmatpush1.msra.mxu0 %v243
    %306 = vmatprep.subr.mxu0 0.0
    %307 = vmatpush1.msra.mxu0 %v244
    %308 = vmatprep.subr.mxu0 0.0
    %309 = vmatpush1.msra.mxu0 %v245
    %310 = vmatprep.subr.mxu0 0.0
    %311 = vmatpush1.msra.mxu0 %v246
    %312 = vmatprep.subr.mxu0 0.0
    %313 = vmatpush1.msra.mxu0 %v247
    %314 = vmatprep.subr.mxu0 0.0
    %315 = vmatpush1.msra.mxu0 %v248
    %316 = vmatprep.subr.mxu0 0.0
    %317 = vmatpush1.msra.mxu0 %v249
    %318 = vmatprep.subr.mxu0 0.0
    %319 = vmatpush1.msra.mxu0 %v250
    %320 = vmatprep.subr.mxu0 0.0
    %321 = vmatpush1.msra.mxu0 %v251
    %322 = vmatprep.subr.mxu0 0.0
    %323 = vmatpush1.msra.mxu0 %v252
    %324 = vmatprep.subr.mxu0 0.0
    %325 = vmatpush1.msra.mxu0 %v253
    %326 = vmatprep.mubr.f32.mxu0 %v187
    %327 = vmatmul.mubr.f32.gmra.mrb[0].mxu0 %v186
    %v328 = vpop.f32.mrb[0].mxu0
    %v329 = vadd.f32 0.0, %v328
    %v330 = vpop.f32.mrb[0].mxu0
    %331 = vdwg.mxu0
    %332 = vmatprep.subr.mxu0 0.0
    %333 = vmatpush1.msra.mxu0 %v260
    %334 = vmatprep.subr.mxu0 0.0
    %335 = vmatpush1.msra.mxu0 0.0
    %336 = vmatprep.subr.mxu0 0.0
    %337 = vmatpush1.msra.mxu0 0.0
    %338 = vmatprep.subr.mxu0 0.0
    %339 = vmatpush1.msra.mxu0 0.0
    %340 = vmatprep.subr.mxu0 0.0
    %341 = vmatpush1.msra.mxu0 0.0
    %342 = vmatprep.subr.mxu0 0.0
    %343 = vmatpush1.msra.mxu0 0.0
    %344 = vmatprep.subr.mxu0 0.0
    %345 = vmatpush1.msra.mxu0 0.0
    %346 = vmatprep.subr.mxu0 0.0
    %347 = vmatpush1.msra.mxu0 0.0
    %348 = vmatprep.subr.mxu0 0.0
    %349 = vmatpush1.msra.mxu0 0.0
    %350 = vmatprep.subr.mxu0 0.0
    %351 = vmatpush1.msra.mxu0 0.0
    %352 = vmatprep.subr.mxu0 0.0
    %353 = vmatpush1.msra.mxu0 0.0
    %354 = vmatprep.subr.mxu0 0.0
    %355 = vmatpush1.msra.mxu0 0.0
    %356 = vmatprep.subr.mxu0 0.0
    %357 = vmatpush1.msra.mxu0 0.0
    %358 = vmatprep.subr.mxu0 0.0
    %359 = vmatpush1.msra.mxu0 0.0
    %360 = vmatprep.subr.mxu0 0.0
    %361 = vmatpush1.msra.mxu0 0.0
    %362 = vmatprep.subr.mxu0 0.0
    %363 = vmatpush1.msra.mxu0 0.0
    %364 = vmatprep.subr.mxu0 0.0
    %365 = vmatpush1.msra.mxu0 0.0
    %366 = vmatprep.subr.mxu0 0.0
    %367 = vmatpush1.msra.mxu0 0.0
    %368 = vmatprep.subr.mxu0 0.0
    %369 = vmatpush1.msra.mxu0 0.0
    %370 = vmatprep.subr.mxu0 0.0
    %371 = vmatpush1.msra.mxu0 0.0
    %372 = vmatprep.subr.mxu0 0.0
    %373 = vmatpush1.msra.mxu0 0.0
    %374 = vmatprep.subr.mxu0 0.0
    %375 = vmatpush1.msra.mxu0 0.0
    %376 = vmatprep.subr.mxu0 0.0
    %377 = vmatpush1.msra.mxu0 0.0
    %378 = vmatprep.subr.mxu0 0.0
    %379 = vmatpush1.msra.mxu0 0.0
    %380 = vmatprep.subr.mxu0 0.0
    %381 = vmatpush1.msra.mxu0 0.0
    %382 = vmatprep.subr.mxu0 0.0
    %383 = vmatpush1.msra.mxu0 0.0
    %384 = vmatprep.subr.mxu0 0.0
    %385 = vmatpush1.msra.mxu0 0.0
    %386 = vmatprep.subr.mxu0 0.0
    %387 = vmatpush1.msra.mxu0 0.0
    %388 = vmatprep.subr.mxu0 0.0
    %389 = vmatpush1.msra.mxu0 0.0
    %390 = vmatprep.subr.mxu0 0.0
    %391 = vmatpush1.msra.mxu0 0.0
    %392 = vmatprep.subr.mxu0 0.0
    %393 = vmatpush1.msra.mxu0 0.0
    %394 = vmatprep.subr.mxu0 0.0
    %395 = vmatpush1.msra.mxu0 0.0
    %396 = vmatprep.mubr.f32.mxu0 0.0
    %397 = vmatmul.mubr.f32.gmra.mrb[0].mxu0 %v257
    %v398 = vpop.f32.mrb[0].mxu0
    %v399 = vadd.f32 %v329, %v398
    %v400 = vpop.f32.mrb[0].mxu0
    %401 = vdwg.mxu0
    %vm402 = vcmask 74752
    %403 = vst.msk [vmem:[#allocation2] sm:$0x3] %vm402, %v399
    // Predicated region
    $region14: #{cnn_forward.1} parent=1 // pred_check
      _
    $region15: #{cnn_forward.1} parent=1 // pred_check_branch
      %405 = sbr.rel (0) target = $region17
    $region16: #{cnn_forward.1} parent=1 // pred_region
      %s407 = ssub.s32 32, 32
      %408 = vsyncadd [#allocation3], %s407
      %s410 = sshll.u32 [#allocation2], 4
      %s411 = int_to_ptr.vmem [resolvable:$true] %s410
      %413 = dma.vmem_to_hbm [thread:$0]  %s411, 32, %s3, [#allocation3]
    $region17: #{cnn_forward.1} parent=1 // pred_fallthru
      _
    // Predicated region
    $region18: #{cnn_forward.1} parent=1 // pred_check
      _
    $region19: #{cnn_forward.1} parent=1 // pred_check_branch
      %415 = sbr.rel (0) target = $region21
    $region20: #{cnn_forward.1} parent=1 // pred_region
      %416 = dma.done [#allocation3], 32
    $region21: #{cnn_forward.1} parent=1 // pred_fallthru
      _
    %417 = vsyncpa [#allocation3], 1

</llo_original>
